<compile_context>
chip_gen: v7x
topology: tpu7x:2x2x1
jax: 0.10.0
libtpu: 0.0.40
codegen_flags: <defaults>
</compile_context>

<pallas_src>
import functools

import jax
import jax.numpy as jnp
from jax.experimental import pallas as pl
from jax.experimental.pallas import tpu as pltpu


# ---------------------------------------------------------------------------
# Kernel
# ---------------------------------------------------------------------------
def _double_conv_kernel(x_ref, m1_ref, b1_ref, m2_ref, b2_ref, o_ref,
                        xs_ref, ys_ref, *, H, W, cin, cmid, cout, d, G):
    """Fused conv3x3+ReLU -> conv3x3+ReLU for one batch group of G images.

    x_ref : (G, H, W*cin)        row-flattened NHWC inputs
    m1_ref: (3, W*cin,  W*cmid)  banded conv1 weights (one matrix per kh)
    b1_ref: (1, W*cmid)          conv1 bias tiled along W (f32)
    m2_ref: (3, W*cmid, W*cout)  banded conv2 weights
    b2_ref: (1, W*cout)          conv2 bias tiled along W (f32)
    o_ref : (G, H, W*cout)       outputs (lane-dense last dim)
    xs_ref: VMEM (G*(H+2d), W*cin)   row-padded staged input  (mm dtype)
    ys_ref: VMEM (G*(H+2d), W*cmid)  row-padded intermediate   (mm dtype)
    """
    Hp = H + 2 * d
    M = G * Hp - 2 * d   # rows of the stacked matmul (2d "garbage" rows per
                         # image boundary are computed but never read back)

    # ---- Stage the G images into the row-padded slab.  Interior writes are
    #      full lane-width (column offset 0); only halo rows are zero-filled.
    xs_ref[pl.ds(0, d), :] = jnp.zeros((d, W * cin), xs_ref.dtype)
    for g in range(G):
        xs_ref[pl.ds(g * Hp + d, H), :] = x_ref[g].astype(xs_ref.dtype)
        n = 2 * d if g < G - 1 else d          # inter-image halo (or last)
        xs_ref[pl.ds(g * Hp + d + H, n), :] = jnp.zeros((n, W * cin),
                                                        xs_ref.dtype)

    # ---- Conv1: 3 banded matmuls (one per kernel row kh) over all G images.
    acc = jnp.dot(xs_ref[pl.ds(0, M), :], m1_ref[0],
                  preferred_element_type=jnp.float32)
    for kh in range(1, 3):
        acc += jnp.dot(xs_ref[pl.ds(kh * d, M), :], m1_ref[kh],
                       preferred_element_type=jnp.float32)
    y1 = jnp.maximum(acc + b1_ref[...], 0.0)

    # ---- Stage intermediate (cast once, to the MXU dtype) and re-zero the
    #      halo strips that the blanket store filled with boundary garbage.
    ys_ref[pl.ds(0, d), :] = jnp.zeros((d, W * cmid), ys_ref.dtype)
    ys_ref[pl.ds(d, M), :] = y1.astype(ys_ref.dtype)
    for g in range(G):
        n = 2 * d if g < G - 1 else d
        ys_ref[pl.ds(g * Hp + d + H, n), :] = jnp.zeros((n, W * cmid),
                                                        ys_ref.dtype)

    # ---- Conv2.
    acc2 = jnp.dot(ys_ref[pl.ds(0, M), :], m2_ref[0],
                   preferred_element_type=jnp.float32)
    for kh in range(1, 3):
        acc2 += jnp.dot(ys_ref[pl.ds(kh * d, M), :], m2_ref[kh],
                        preferred_element_type=jnp.float32)
    out = jnp.maximum(acc2 + b2_ref[...], 0.0)

    # ---- Extract per-image valid rows (skip the 2d garbage rows) and store.
    for g in range(G):
        o_ref[g] = out[g * Hp: g * Hp + H].astype(o_ref.dtype)


# ---------------------------------------------------------------------------
# Wrapper-side weight preparation (tiny; runs in XLA outside the kernel)
# ---------------------------------------------------------------------------
def _banded_weights(w_hwio, W, dil):
    """(3,3,Cin,Cout) HWIO -> (3, W*Cin, W*Cout) per-kh banded matrices.

    M[kh][(w + (kw-1)*d)*Cin + ci, w*Cout + co] = w_hwio[kh, kw, ci, co]
    with out-of-range width taps omitted (they multiply the zero pad), so
    (x_rows[h + (kh-1)*d] @ M[kh]) summed over kh is the 'same' conv.
    """
    KH, KW, cin, cout = w_hwio.shape
    mats = []
    for kh in range(KH):
        m = jnp.zeros((W * cin, W * cout), w_hwio.dtype)
        for kw in range(KW):
            # shift[i, j] = 1 iff input col i == output col j + (kw-1)*d
            shift = jnp.eye(W, W, k=-(kw - 1) * dil, dtype=w_hwio.dtype)
            m = m + jnp.einsum("ij,ab->iajb", shift,
                               w_hwio[kh, kw]).reshape(W * cin, W * cout)
        mats.append(m)
    return jnp.stack(mats, axis=0)


def _pick_batch_group(B, Hp, target_rows=256):
    """Largest divisor of B with ~target_rows stacked matmul rows."""
    g = min(B, max(1, target_rows // Hp))
    while B % g:
        g -= 1
    return g


# ---------------------------------------------------------------------------
# Public forward (matches PyTorch DoubleConv: NCHW in / NCHW out)
# ---------------------------------------------------------------------------
def double_conv_forward(x_nchw, params, dilation=1, batch_group=None,
                        matmul_dtype=jnp.bfloat16):
    w1, b1, w2, b2 = params                  # HWIO weights, (C,) biases
    B, Cin, H, W = x_nchw.shape
    assert w1.shape[:3] == (3, 3, Cin)
    Cmid = w1.shape[3]
    assert w2.shape[:3] == (3, 3, Cmid)
    Cout = w2.shape[3]
    d = dilation
    Hp = H + 2 * d

    G = batch_group if batch_group is not None else _pick_batch_group(B, Hp)
    assert B % G == 0, f"batch_group {G} must divide batch {B}"
    mm_dtype = jnp.dtype(matmul_dtype)

    # NCHW -> row-flattened NHWC, grouped: (B/G, G, H, W*Cin).
    x_rows = jnp.transpose(x_nchw, (0, 2, 3, 1)).reshape(B // G, G, H, W * Cin)

    # Pre-cast banded weights to the MXU dtype once, in the wrapper.
    m1 = _banded_weights(w1, W, d).astype(mm_dtype)   # (3, W*Cin,  W*Cmid)
    m2 = _banded_weights(w2, W, d).astype(mm_dtype)   # (3, W*Cmid, W*Cout)
    b1_t = jnp.tile(b1.astype(jnp.float32), W).reshape(1, W * Cmid)
    b2_t = jnp.tile(b2.astype(jnp.float32), W).reshape(1, W * Cout)

    kernel = functools.partial(
        _double_conv_kernel, H=H, W=W, cin=Cin, cmid=Cmid, cout=Cout,
        d=d, G=G)

    # Explicit VMEM budget: double-buffered x/out blocks, single-buffered
    # weights, plus the two staging slabs; generous 2x headroom.
    isz_x = jnp.dtype(x_nchw.dtype).itemsize
    isz_m = mm_dtype.itemsize
    block_bytes = G * H * W * (Cin + Cout) * isz_x
    weight_bytes = (m1.size + m2.size) * isz_m + (W * Cmid + W * Cout) * 4
    scratch_bytes = G * Hp * W * (Cin + Cmid) * isz_m
    need = 2 * block_bytes + 2 * weight_bytes + scratch_bytes
    vmem_limit = int(min(96 << 20, max(32 << 20, 2 * need)))

    out_rows = pl.pallas_call(
        kernel,
        out_shape=jax.ShapeDtypeStruct((B // G, G, H, W * Cout), x_nchw.dtype),
        grid_spec=pltpu.PrefetchScalarGridSpec(
            num_scalar_prefetch=0,
            grid=(B // G,),
            in_specs=[
                pl.BlockSpec((None, G, H, W * Cin), lambda i: (i, 0, 0, 0)),
                # Grid-invariant operands: single-buffer them.
                pl.BlockSpec(m1.shape, lambda i: (0, 0, 0),
                             pipeline_mode=pl.Buffered(1)),
                pl.BlockSpec((1, W * Cmid), lambda i: (0, 0),
                             pipeline_mode=pl.Buffered(1)),
                pl.BlockSpec(m2.shape, lambda i: (0, 0, 0),
                             pipeline_mode=pl.Buffered(1)),
                pl.BlockSpec((1, W * Cout), lambda i: (0, 0),
                             pipeline_mode=pl.Buffered(1)),
            ],
            out_specs=pl.BlockSpec((None, G, H, W * Cout),
                                   lambda i: (i, 0, 0, 0)),
            scratch_shapes=[
                pltpu.VMEM((G * Hp, W * Cin), mm_dtype),
                pltpu.VMEM((G * Hp, W * Cmid), mm_dtype),
            ],
        ),
        compiler_params=pltpu.CompilerParams(
            dimension_semantics=("parallel",),
            vmem_limit_bytes=vmem_limit),
    )(x_rows, m1, b1_t, m2, b2_t)

    out = out_rows.reshape(B, H, W, Cout)
    return jnp.transpose(out, (0, 3, 1, 2))  # NHWC -> NCHW


# ---------------------------------------------------------------------------
# Params + pure-JAX reference (PyTorch semantics) for self-check
# ---------------------------------------------------------------------------
def init_double_conv_params(key, in_channels, out_channels, dtype=jnp.float32):
    k1, k2, k3, k4 = jax.random.split(key, 4)
    fan1 = in_channels * 9
    fan2 = out_channels * 9
    w1 = jax.random.uniform(k1, (3, 3, in_channels, out_channels), dtype,
                            minval=-1.0, maxval=1.0) / jnp.sqrt(fan1)
    b1 = jax.random.uniform(k2, (out_channels,), dtype,
                            minval=-1.0, maxval=1.0) / jnp.sqrt(fan1)
    w2 = jax.random.uniform(k3, (3, 3, out_channels, out_channels), dtype,
                            minval=-1.0, maxval=1.0) / jnp.sqrt(fan2)
    b2 = jax.random.uniform(k4, (out_channels,), dtype,
                            minval=-1.0, maxval=1.0) / jnp.sqrt(fan2)
    return w1, b1, w2, b2


def _reference_double_conv(x_nchw, params, dilation=1):
    w1, b1, w2, b2 = params

    def conv(x, w_hwio, b):
        w_oihw = jnp.transpose(w_hwio, (3, 2, 0, 1))
        y = jax.lax.conv_general_dilated(
            x, w_oihw, window_strides=(1, 1),
            padding=[(dilation, dilation), (dilation, dilation)],
            rhs_dilation=(dilation, dilation),
            dimension_numbers=("NCHW", "OIHW", "NCHW"))
        return jnp.maximum(y + b[None, :, None, None], 0.0)

    return conv(conv(x_nchw, w1, b1), w2, b2)


if __name__ == "__main__":
    B, Cin, Cout, H, W = 2, 4, 8, 16, 16
    dilation = 1

    key = jax.random.PRNGKey(0)
    kx, kp = jax.random.split(key)
    x = jax.random.normal(kx, (B, Cin, H, W), dtype=jnp.float32)
    params = init_double_conv_params(kp, Cin, Cout)

    ref = jax.block_until_ready(_reference_double_conv(x, params, dilation))

    # 1) Exact-arithmetic check, multi-step grid (G=1, grid=(2,)).
    out_a = double_conv_forward(x, params, dilation=dilation,
                                batch_group=1, matmul_dtype=jnp.float32)
    out_a = jax.block_until_ready(out_a)
    assert out_a.shape == (B, Cout, H, W)
    assert jnp.allclose(out_a, ref, atol=1e-4, rtol=1e-4), \
        float(jnp.max(jnp.abs(out_a - ref)))

    # 2) Exact-arithmetic check, stacked batch group (G=2, grid=(1,)).
    out_b = double_conv_forward(x, params, dilation=dilation,
                                batch_group=2, matmul_dtype=jnp.float32)
    out_b = jax.block_until_ready(out_b)
    assert jnp.allclose(out_b, ref, atol=1e-4, rtol=1e-4), \
        float(jnp.max(jnp.abs(out_b - ref)))

    # 3) Default fast path: bf16 MXU inputs, f32 accumulation (loose tol).
    out_c = double_conv_forward(x, params, dilation=dilation)
    out_c = jax.block_until_ready(out_c)
    assert out_c.shape == (B, Cout, H, W)
    assert jnp.allclose(out_c, ref, atol=5e-2, rtol=5e-2), \
        float(jnp.max(jnp.abs(out_c - ref)))

    print("KERNEL_OK")
</pallas_src>

<mosaic_0001>
module attributes {stable_mosaic.version = 11 : i64} {
  func.func @_double_conv_kernel(%arg0: i32, %arg1: memref<1x1x16x64xf32, #tpu.memory_space<vmem>>, %arg2: memref<3x64x128xf32, #tpu.memory_space<vmem>>, %arg3: memref<1x128xf32, #tpu.memory_space<vmem>>, %arg4: memref<3x128x128xf32, #tpu.memory_space<vmem>>, %arg5: memref<1x128xf32, #tpu.memory_space<vmem>>, %arg6: memref<1x1x16x128xf32, #tpu.memory_space<vmem>>, %arg7: memref<18x64xf32, #tpu.memory_space<vmem>>, %arg8: memref<18x128xf32, #tpu.memory_space<vmem>>) attributes {dimension_semantics = [#tpu.dimension_semantics<parallel>], iteration_bounds = array<i64: 2>, scalar_prefetch = 0 : i64, scratch_operands = 2 : i64, tpu.core_type = #tpu.core_type<tc>, window_params = [{transform_indices = @transform_0, window_bounds = array<i64: 1, 1, 16, 64>}, {pipeline_mode = #tpu.pipeline_mode<synchronous>, transform_indices = @transform_1, window_bounds = array<i64: 3, 64, 128>}, {pipeline_mode = #tpu.pipeline_mode<synchronous>, transform_indices = @transform_2, window_bounds = array<i64: 1, 128>}, {pipeline_mode = #tpu.pipeline_mode<synchronous>, transform_indices = @transform_3, window_bounds = array<i64: 3, 128, 128>}, {pipeline_mode = #tpu.pipeline_mode<synchronous>, transform_indices = @transform_4, window_bounds = array<i64: 1, 128>}, {transform_indices = @transform_5, window_bounds = array<i64: 1, 1, 16, 128>}]} {
    %cst = arith.constant 0.000000e+00 : f32
    %0 = vector.broadcast %cst : f32 to vector<1x64xf32>
    %c0 = arith.constant 0 : index
    %c0_0 = arith.constant 0 : index
    %1 = vector.load %arg7[%c0, %c0_0] : memref<18x64xf32, #tpu.memory_space<vmem>>, vector<1x64xf32>
    tpu.vector_store %arg7[%c0, %c0_0], %0 {strides = array<i32>} : memref<18x64xf32, #tpu.memory_space<vmem>>, vector<1x64xf32>,
    %c0_1 = arith.constant 0 : index
    %c0_2 = arith.constant 0 : index
    %c0_3 = arith.constant 0 : index
    %c0_4 = arith.constant 0 : index
    %2 = vector.load %arg1[%c0_1, %c0_2, %c0_3, %c0_4] : memref<1x1x16x64xf32, #tpu.memory_space<vmem>>, vector<1x1x16x64xf32>
    %3 = vector.shape_cast %2 : vector<1x1x16x64xf32> to vector<16x64xf32>
    %c1 = arith.constant 1 : index
    %c0_5 = arith.constant 0 : index
    %4 = vector.load %arg7[%c1, %c0_5] : memref<18x64xf32, #tpu.memory_space<vmem>>, vector<16x64xf32>
    tpu.vector_store %arg7[%c1, %c0_5], %3 {strides = array<i32>} : memref<18x64xf32, #tpu.memory_space<vmem>>, vector<16x64xf32>,
    %cst_6 = arith.constant 0.000000e+00 : f32
    %5 = vector.broadcast %cst_6 : f32 to vector<1x64xf32>
    %c17 = arith.constant 17 : index
    %c0_7 = arith.constant 0 : index
    %6 = vector.load %arg7[%c17, %c0_7] : memref<18x64xf32, #tpu.memory_space<vmem>>, vector<1x64xf32>
    tpu.vector_store %arg7[%c17, %c0_7], %5 {strides = array<i32>} : memref<18x64xf32, #tpu.memory_space<vmem>>, vector<1x64xf32>,
    %c0_8 = arith.constant 0 : index
    %c0_9 = arith.constant 0 : index
    %7 = vector.load %arg7[%c0_8, %c0_9] : memref<18x64xf32, #tpu.memory_space<vmem>>, vector<16x64xf32>
    %c0_10 = arith.constant 0 : index
    %c0_11 = arith.constant 0 : index
    %c0_12 = arith.constant 0 : index
    %8 = vector.load %arg2[%c0_10, %c0_11, %c0_12] : memref<3x64x128xf32, #tpu.memory_space<vmem>>, vector<1x64x128xf32>
    %9 = vector.shape_cast %8 : vector<1x64x128xf32> to vector<64x128xf32>
    %cst_13 = arith.constant dense<0.000000e+00> : vector<16x128xf32>
    %10 = tpu.matmul %7, %9, %cst_13 {dimension_numbers = #tpu.dot_dimension_numbers<[1], [0], [0], [1], [0, 0, 1, 1], [], []>} : vector<16x64xf32>, vector<64x128xf32>, vector<16x128xf32> -> vector<16x128xf32>
    %c1_14 = arith.constant 1 : index
    %c0_15 = arith.constant 0 : index
    %11 = vector.load %arg7[%c1_14, %c0_15] : memref<18x64xf32, #tpu.memory_space<vmem>>, vector<16x64xf32>
    %c1_16 = arith.constant 1 : index
    %c0_17 = arith.constant 0 : index
    %c0_18 = arith.constant 0 : index
    %12 = vector.load %arg2[%c1_16, %c0_17, %c0_18] : memref<3x64x128xf32, #tpu.memory_space<vmem>>, vector<1x64x128xf32>
    %13 = vector.shape_cast %12 : vector<1x64x128xf32> to vector<64x128xf32>
    %cst_19 = arith.constant dense<0.000000e+00> : vector<16x128xf32>
    %14 = tpu.matmul %11, %13, %cst_19 {dimension_numbers = #tpu.dot_dimension_numbers<[1], [0], [0], [1], [0, 0, 1, 1], [], []>} : vector<16x64xf32>, vector<64x128xf32>, vector<16x128xf32> -> vector<16x128xf32>
    %15 = arith.addf %10, %14 : vector<16x128xf32>
    %c2 = arith.constant 2 : index
    %c0_20 = arith.constant 0 : index
    %16 = vector.load %arg7[%c2, %c0_20] : memref<18x64xf32, #tpu.memory_space<vmem>>, vector<16x64xf32>
    %c2_21 = arith.constant 2 : index
    %c0_22 = arith.constant 0 : index
    %c0_23 = arith.constant 0 : index
    %17 = vector.load %arg2[%c2_21, %c0_22, %c0_23] : memref<3x64x128xf32, #tpu.memory_space<vmem>>, vector<1x64x128xf32>
    %18 = vector.shape_cast %17 : vector<1x64x128xf32> to vector<64x128xf32>
    %cst_24 = arith.constant dense<0.000000e+00> : vector<16x128xf32>
    %19 = tpu.matmul %16, %18, %cst_24 {dimension_numbers = #tpu.dot_dimension_numbers<[1], [0], [0], [1], [0, 0, 1, 1], [], []>} : vector<16x64xf32>, vector<64x128xf32>, vector<16x128xf32> -> vector<16x128xf32>
    %20 = arith.addf %15, %19 : vector<16x128xf32>
    %c0_25 = arith.constant 0 : index
    %c0_26 = arith.constant 0 : index
    %21 = vector.load %arg3[%c0_25, %c0_26] : memref<1x128xf32, #tpu.memory_space<vmem>>, vector<1x128xf32>
    %22 = vector.broadcast %21 : vector<1x128xf32> to vector<16x128xf32>
    %23 = arith.addf %20, %22 : vector<16x128xf32>
    %cst_27 = arith.constant 0.000000e+00 : f32
    %24 = vector.broadcast %cst_27 : f32 to vector<16x128xf32>
    %25 = arith.maximumf %23, %24 : vector<16x128xf32>
    %cst_28 = arith.constant 0.000000e+00 : f32
    %26 = vector.broadcast %cst_28 : f32 to vector<1x128xf32>
    %c0_29 = arith.constant 0 : index
    %c0_30 = arith.constant 0 : index
    %27 = vector.load %arg8[%c0_29, %c0_30] : memref<18x128xf32, #tpu.memory_space<vmem>>, vector<1x128xf32>
    tpu.vector_store %arg8[%c0_29, %c0_30], %26 {strides = array<i32>} : memref<18x128xf32, #tpu.memory_space<vmem>>, vector<1x128xf32>,
    %c1_31 = arith.constant 1 : index
    %c0_32 = arith.constant 0 : index
    %28 = vector.load %arg8[%c1_31, %c0_32] : memref<18x128xf32, #tpu.memory_space<vmem>>, vector<16x128xf32>
    tpu.vector_store %arg8[%c1_31, %c0_32], %25 {strides = array<i32>} : memref<18x128xf32, #tpu.memory_space<vmem>>, vector<16x128xf32>,
    %cst_33 = arith.constant 0.000000e+00 : f32
    %29 = vector.broadcast %cst_33 : f32 to vector<1x128xf32>
    %c17_34 = arith.constant 17 : index
    %c0_35 = arith.constant 0 : index
    %30 = vector.load %arg8[%c17_34, %c0_35] : memref<18x128xf32, #tpu.memory_space<vmem>>, vector<1x128xf32>
    tpu.vector_store %arg8[%c17_34, %c0_35], %29 {strides = array<i32>} : memref<18x128xf32, #tpu.memory_space<vmem>>, vector<1x128xf32>,
    %c0_36 = arith.constant 0 : index
    %c0_37 = arith.constant 0 : index
    %31 = vector.load %arg8[%c0_36, %c0_37] : memref<18x128xf32, #tpu.memory_space<vmem>>, vector<16x128xf32>
    %c0_38 = arith.constant 0 : index
    %c0_39 = arith.constant 0 : index
    %c0_40 = arith.constant 0 : index
    %32 = vector.load %arg4[%c0_38, %c0_39, %c0_40] : memref<3x128x128xf32, #tpu.memory_space<vmem>>, vector<1x128x128xf32>
    %33 = vector.shape_cast %32 : vector<1x128x128xf32> to vector<128x128xf32>
    %cst_41 = arith.constant dense<0.000000e+00> : vector<16x128xf32>
    %34 = tpu.matmul %31, %33, %cst_41 {dimension_numbers = #tpu.dot_dimension_numbers<[1], [0], [0], [1], [0, 0, 1, 1], [], []>} : vector<16x128xf32>, vector<128x128xf32>, vector<16x128xf32> -> vector<16x128xf32>
    %c1_42 = arith.constant 1 : index
    %c0_43 = arith.constant 0 : index
    %35 = vector.load %arg8[%c1_42, %c0_43] : memref<18x128xf32, #tpu.memory_space<vmem>>, vector<16x128xf32>
    %c1_44 = arith.constant 1 : index
    %c0_45 = arith.constant 0 : index
    %c0_46 = arith.constant 0 : index
    %36 = vector.load %arg4[%c1_44, %c0_45, %c0_46] : memref<3x128x128xf32, #tpu.memory_space<vmem>>, vector<1x128x128xf32>
    %37 = vector.shape_cast %36 : vector<1x128x128xf32> to vector<128x128xf32>
    %cst_47 = arith.constant dense<0.000000e+00> : vector<16x128xf32>
    %38 = tpu.matmul %35, %37, %cst_47 {dimension_numbers = #tpu.dot_dimension_numbers<[1], [0], [0], [1], [0, 0, 1, 1], [], []>} : vector<16x128xf32>, vector<128x128xf32>, vector<16x128xf32> -> vector<16x128xf32>
    %39 = arith.addf %34, %38 : vector<16x128xf32>
    %c2_48 = arith.constant 2 : index
    %c0_49 = arith.constant 0 : index
    %40 = vector.load %arg8[%c2_48, %c0_49] : memref<18x128xf32, #tpu.memory_space<vmem>>, vector<16x128xf32>
    %c2_50 = arith.constant 2 : index
    %c0_51 = arith.constant 0 : index
    %c0_52 = arith.constant 0 : index
    %41 = vector.load %arg4[%c2_50, %c0_51, %c0_52] : memref<3x128x128xf32, #tpu.memory_space<vmem>>, vector<1x128x128xf32>
    %42 = vector.shape_cast %41 : vector<1x128x128xf32> to vector<128x128xf32>
    %cst_53 = arith.constant dense<0.000000e+00> : vector<16x128xf32>
    %43 = tpu.matmul %40, %42, %cst_53 {dimension_numbers = #tpu.dot_dimension_numbers<[1], [0], [0], [1], [0, 0, 1, 1], [], []>} : vector<16x128xf32>, vector<128x128xf32>, vector<16x128xf32> -> vector<16x128xf32>
    %44 = arith.addf %39, %43 : vector<16x128xf32>
    %c0_54 = arith.constant 0 : index
    %c0_55 = arith.constant 0 : index
    %45 = vector.load %arg5[%c0_54, %c0_55] : memref<1x128xf32, #tpu.memory_space<vmem>>, vector<1x128xf32>
    %46 = vector.broadcast %45 : vector<1x128xf32> to vector<16x128xf32>
    %47 = arith.addf %44, %46 : vector<16x128xf32>
    %cst_56 = arith.constant 0.000000e+00 : f32
    %48 = vector.broadcast %cst_56 : f32 to vector<16x128xf32>
    %49 = arith.maximumf %47, %48 : vector<16x128xf32>
    %c0_57 = arith.constant 0 : index
    %c0_58 = arith.constant 0 : index
    %c0_59 = arith.constant 0 : index
    %c0_60 = arith.constant 0 : index
    %50 = vector.load %arg6[%c0_57, %c0_58, %c0_59, %c0_60] : memref<1x1x16x128xf32, #tpu.memory_space<vmem>>, vector<1x1x16x128xf32>
    %51 = vector.shape_cast %50 : vector<1x1x16x128xf32> to vector<16x128xf32>
    %52 = vector.shape_cast %49 : vector<16x128xf32> to vector<1x1x16x128xf32>
    tpu.vector_store %arg6[%c0_57, %c0_58, %c0_59, %c0_60], %52 {strides = array<i32>} : memref<1x1x16x128xf32, #tpu.memory_space<vmem>>, vector<1x1x16x128xf32>,
    return
  }
  func.func @transform_0(%arg0: i32) -> (i32, i32, i32, i32) {
    %c0_i32 = arith.constant 0 : i32
    %c0_i32_0 = arith.constant 0 : i32
    %c0_i32_1 = arith.constant 0 : i32
    %c0_i32_2 = arith.constant 0 : i32
    return %arg0, %c0_i32, %c0_i32_0, %c0_i32_1 : i32, i32, i32, i32
  }
  func.func @transform_1(%arg0: i32) -> (i32, i32, i32) {
    %c0_i32 = arith.constant 0 : i32
    %c0_i32_0 = arith.constant 0 : i32
    %c0_i32_1 = arith.constant 0 : i32
    %c0_i32_2 = arith.constant 0 : i32
    return %c0_i32, %c0_i32_0, %c0_i32_1 : i32, i32, i32
  }
  func.func @transform_2(%arg0: i32) -> (i32, i32) {
    %c0_i32 = arith.constant 0 : i32
    %c0_i32_0 = arith.constant 0 : i32
    %c0_i32_1 = arith.constant 0 : i32
    return %c0_i32, %c0_i32_0 : i32, i32
  }
  func.func @transform_3(%arg0: i32) -> (i32, i32, i32) {
    %c0_i32 = arith.constant 0 : i32
    %c0_i32_0 = arith.constant 0 : i32
    %c0_i32_1 = arith.constant 0 : i32
    %c0_i32_2 = arith.constant 0 : i32
    return %c0_i32, %c0_i32_0, %c0_i32_1 : i32, i32, i32
  }
  func.func @transform_4(%arg0: i32) -> (i32, i32) {
    %c0_i32 = arith.constant 0 : i32
    %c0_i32_0 = arith.constant 0 : i32
    %c0_i32_1 = arith.constant 0 : i32
    return %c0_i32, %c0_i32_0 : i32, i32
  }
  func.func @transform_5(%arg0: i32) -> (i32, i32, i32, i32) {
    %c0_i32 = arith.constant 0 : i32
    %c0_i32_0 = arith.constant 0 : i32
    %c0_i32_1 = arith.constant 0 : i32
    %c0_i32_2 = arith.constant 0 : i32
    return %arg0, %c0_i32, %c0_i32_0, %c0_i32_1 : i32, i32, i32, i32
  }
}

</mosaic_0001>

<llo_original>
// kernel: tpu_custom_call.1
$region0: #{tpu_custom_call.1}
  #allocation0 [shape = 'u32[]', space=smem, size = 0x4, offset = 0x4, fixed_abs, tag = 'smem constant byte address 0x4 - core index']
  #allocation1 [shape = 'u32[144,128]{1,0:T(1,128)}', space=vmem, size = 0x12000, scoped, tag = 'internal scratch']
  #allocation2 [shape = 'f32[18,64]{1,0:T(8,128)}', space=vmem, size = 0x3000, scoped, tag = 'scratch operand']
  #allocation3 [shape = 'f32[18,128]{1,0:T(8,128)}', space=vmem, size = 0x3000, scoped, tag = 'scratch operand']
  %s0 = inlined_call_operand.hbm [shape: f32[2,1,16,64], index: 0, kind: input, shape index: {}]
  %s1 = inlined_call_operand.hbm [shape: f32[3,64,128], index: 1, kind: input, shape index: {}]
  %s2 = inlined_call_operand.vmem [shape: f32[1,128], index: 2, kind: input, shape index: {}]
  %s3 = inlined_call_operand.hbm [shape: f32[3,128,128], index: 3, kind: input, shape index: {}]
  %s4 = inlined_call_operand.vmem [shape: f32[1,128], index: 4, kind: input, shape index: {}]
  %s5 = inlined_call_operand.hbm [shape: f32[2,1,16,128], index: 5, kind: output, shape index: {}]
  %s6 = sld [smem:[#allocation0]]
  $region65: #{tpu_custom_call.1} parent=0
    _
  %s8 = ssub.s32 1, %s6
  %s9 = scalar_select 0, %s8, %s6
  $region1: #{tpu_custom_call.1} parent=0
    #allocation4 [shape = 'u8[16384]{0}', space=vmem, size = 0x4000, scoped, tag = 'input window, operand 0']
    #allocation5 [shape = 's32[2]{0}', space=sflag, size = 0x8, scoped, tag = 'scoped memory for tpu_custom_call.1']
    #allocation6 [shape = 's32[2]{0}', space=sflag, size = 0x8, scoped, tag = 'scoped memory for tpu_custom_call.1']
    #allocation7 [shape = 'u8[98304]{0}', space=vmem, size = 0x18000, scoped, tag = 'input window, operand 1, single buffered']
    #allocation8 [shape = 's32[1]{0}', space=sflag, size = 0x4, scoped, tag = 'scoped memory for tpu_custom_call.1']
    #allocation9 [shape = 'u8[196608]{0}', space=vmem, size = 0x30000, scoped, tag = 'input window, operand 3, single buffered']
    #allocation10 [shape = 'u8[16384]{0}', space=vmem, size = 0x4000, scoped, tag = 'output window, operand 0']
    %10 = vsyncpa [#allocation5], 0
    %s11 = scalar_lea.sflag [#allocation5], 1
    %12 = vsyncpa %s11, 0
    %13 = vsyncpa [#allocation8], 0
    %14 = vsyncpa [#allocation6], 0
    %s15 = scalar_lea.sflag [#allocation6], 1
    %16 = vsyncpa %s15, 0
    loop: start=0, step=1, limit=4
    $region2: #{tpu_custom_call.1} parent=1 // loop_pre_header
      _
    $region3: #{tpu_custom_call.1} parent=1 // loop_header
      %s18 = sphi 0, %s22
      %p19 = scmp.ge.s32.totalorder %s18, 4
      %s28 = sphi 0, %s30
      %s31 = sphi 0, %s28
      %s32 = sphi 0, %s31
      %s48 = sphi 0, %s32
      %s52 = sphi 0, %s52
      %s54 = sphi 0, %s52
      %s55 = sphi 0, %s54
      %s69 = sphi 0, %s55
      %s73 = sphi 0, %s73
      %s75 = sphi 0, %s73
      %s76 = sphi 0, %s75
      %s90 = sphi 0, %s76
      %s94 = sphi 0, %s94
      %s96 = sphi 0, %s94
      %s97 = sphi 0, %s96
      %s111 = sphi 0, %s97
      %s115 = sphi 0, %s115
      %s117 = sphi 0, %s115
      %s118 = sphi 0, %s117
      %s132 = sphi 0, %s118
      %s138 = sphi 0, %s140
      %s141 = sphi 0, %s138
      %s142 = sphi 0, %s141
      %s158 = sphi 0, %s142
    $region4: #{tpu_custom_call.1} parent=1 // loop_header_branch
      %21 = sbr.rel (%p19) target = $region8
    $region5: #{tpu_custom_call.1} parent=1 // loop_body
      %s23 = ssub.s32 %s18, 1
      %s24 = ssub.s32 %s18, 2
      %s25 = sadd.s32 %s18, 1
      %s26 = ssub.s32 %s18, %s25
      %p27 = scmp.eq.s32.totalorder %s26, 0
      %s29 = sadd.s32 %s28, 1
      %s30 = scalar_select %p27, %s28, %s29
      %p33 = pneg %p27
      %p34 = scmp.eq.s32.totalorder %s18, 1
      %p35 = por %p33, %p34
      %p36 = scmp.ne.s32.totalorder %s28, %s31
      %p37 = scmp.eq.s32.totalorder %s18, 0
      %p38 = por %p36, %p37
      %p39 = scmp.ne.s32.totalorder %s28, %s31
      %p40 = scmp.eq.s32.totalorder %s23, 1
      %p41 = por %p39, %p40
      %p42 = scmp.ne.s32.totalorder %s31, %s32
      %p43 = scmp.eq.s32.totalorder %s23, 0
      %p44 = por %p42, %p43
      %p45 = scmp.ne.s32.totalorder %s31, %s32
      %p46 = scmp.eq.s32.totalorder %s24, 1
      %p47 = por %p45, %p46
      %p49 = scmp.ne.s32.totalorder %s32, %s48
      %p50 = scmp.eq.s32.totalorder %s24, 0
      %p51 = por %p49, %p50
      %s53 = sadd.s32 %s52, 1
      %p56 = scmp.eq.s32.totalorder %s18, 1
      %p57 = scmp.ne.s32.totalorder %s52, %s54
      %p58 = scmp.eq.s32.totalorder %s18, 0
      %p59 = por %p57, %p58
      %p60 = scmp.ne.s32.totalorder %s52, %s54
      %p61 = scmp.eq.s32.totalorder %s23, 1
      %p62 = por %p60, %p61
      %p63 = scmp.ne.s32.totalorder %s54, %s55
      %p64 = scmp.eq.s32.totalorder %s23, 0
      %p65 = por %p63, %p64
      %p66 = scmp.ne.s32.totalorder %s54, %s55
      %p67 = scmp.eq.s32.totalorder %s24, 1
      %p68 = por %p66, %p67
      %p70 = scmp.ne.s32.totalorder %s55, %s69
      %p71 = scmp.eq.s32.totalorder %s24, 0
      %p72 = por %p70, %p71
      %s74 = sadd.s32 %s73, 1
      %p77 = scmp.eq.s32.totalorder %s18, 1
      %p78 = scmp.ne.s32.totalorder %s73, %s75
      %p79 = scmp.eq.s32.totalorder %s18, 0
      %p80 = por %p78, %p79
      %p81 = scmp.ne.s32.totalorder %s73, %s75
      %p82 = scmp.eq.s32.totalorder %s23, 1
      %p83 = por %p81, %p82
      %p84 = scmp.ne.s32.totalorder %s75, %s76
      %p85 = scmp.eq.s32.totalorder %s23, 0
      %p86 = por %p84, %p85
      %p87 = scmp.ne.s32.totalorder %s75, %s76
      %p88 = scmp.eq.s32.totalorder %s24, 1
      %p89 = por %p87, %p88
      %p91 = scmp.ne.s32.totalorder %s76, %s90
      %p92 = scmp.eq.s32.totalorder %s24, 0
      %p93 = por %p91, %p92
      %s95 = sadd.s32 %s94, 1
      %p98 = scmp.eq.s32.totalorder %s18, 1
      %p99 = scmp.ne.s32.totalorder %s94, %s96
      %p100 = scmp.eq.s32.totalorder %s18, 0
      %p101 = por %p99, %p100
      %p102 = scmp.ne.s32.totalorder %s94, %s96
      %p103 = scmp.eq.s32.totalorder %s23, 1
      %p104 = por %p102, %p103
      %p105 = scmp.ne.s32.totalorder %s96, %s97
      %p106 = scmp.eq.s32.totalorder %s23, 0
      %p107 = por %p105, %p106
      %p108 = scmp.ne.s32.totalorder %s96, %s97
      %p109 = scmp.eq.s32.totalorder %s24, 1
      %p110 = por %p108, %p109
      %p112 = scmp.ne.s32.totalorder %s97, %s111
      %p113 = scmp.eq.s32.totalorder %s24, 0
      %p114 = por %p112, %p113
      %s116 = sadd.s32 %s115, 1
      %p119 = scmp.eq.s32.totalorder %s18, 1
      %p120 = scmp.ne.s32.totalorder %s115, %s117
      %p121 = scmp.eq.s32.totalorder %s18, 0
      %p122 = por %p120, %p121
      %p123 = scmp.ne.s32.totalorder %s115, %s117
      %p124 = scmp.eq.s32.totalorder %s23, 1
      %p125 = por %p123, %p124
      %p126 = scmp.ne.s32.totalorder %s117, %s118
      %p127 = scmp.eq.s32.totalorder %s23, 0
      %p128 = por %p126, %p127
      %p129 = scmp.ne.s32.totalorder %s117, %s118
      %p130 = scmp.eq.s32.totalorder %s24, 1
      %p131 = por %p129, %p130
      %p133 = scmp.ne.s32.totalorder %s118, %s132
      %p134 = scmp.eq.s32.totalorder %s24, 0
      %p135 = por %p133, %p134
      %s136 = ssub.s32 %s18, %s25
      %p137 = scmp.eq.s32.totalorder %s136, 0
      %s139 = sadd.s32 %s138, 1
      %s140 = scalar_select %p137, %s138, %s139
      %p143 = pneg %p137
      %p144 = scmp.eq.s32.totalorder %s18, 1
      %p145 = por %p143, %p144
      %p146 = scmp.ne.s32.totalorder %s138, %s141
      %p147 = scmp.eq.s32.totalorder %s18, 0
      %p148 = por %p146, %p147
      %p149 = scmp.ne.s32.totalorder %s138, %s141
      %p150 = scmp.eq.s32.totalorder %s23, 1
      %p151 = por %p149, %p150
      %p152 = scmp.ne.s32.totalorder %s141, %s142
      %p153 = scmp.eq.s32.totalorder %s23, 0
      %p154 = por %p152, %p153
      %p155 = scmp.ne.s32.totalorder %s141, %s142
      %p156 = scmp.eq.s32.totalorder %s24, 1
      %p157 = por %p155, %p156
      %p159 = scmp.ne.s32.totalorder %s142, %s158
      %p160 = scmp.eq.s32.totalorder %s24, 0
      %p161 = por %p159, %p160
      %p162 = scmp.le.s32.totalorder 1, %s18
      %p163 = scmp.lt.s32.totalorder %s18, 3
      %p164 = pnand %p162, %p163
      %p165 = pneg %p164
      // Predicated region
      $region9: #{tpu_custom_call.1} parent=5 // pred_check
        _
      $region10: #{tpu_custom_call.1} parent=5 // pred_check_branch
        %167 = sbr.rel (%p164) target = $region12
      $region11: #{tpu_custom_call.1} parent=5 // pred_region
        %s168 = ssub.s32 %s18, 1
        // Predicated region
        $region13: #{tpu_custom_call.1} parent=11 // pred_check
          %p169 = pneg %p65
        $region14: #{tpu_custom_call.1} parent=11 // pred_check_branch
          %171 = sbr.rel (%p169) target = $region16
        $region15: #{tpu_custom_call.1} parent=11 // pred_region
          %s173 = ssub.s32 3072, 3072
          %174 = vsyncadd [#allocation8], %s173
          %s175 = sshll.u32 [#allocation7], 4
          %s176 = int_to_ptr.vmem [resolvable:$true] %s175
          %181 = dma.hbm_to_vmem [thread:$0]  %s1, 3072, %s176, [#allocation8], 128, 128, 8
        $region16: #{tpu_custom_call.1} parent=11 // pred_fallthru
          _
        // Predicated region
        $region17: #{tpu_custom_call.1} parent=11 // pred_check
          %p182 = pneg %p86
        $region18: #{tpu_custom_call.1} parent=11 // pred_check_branch
          %184 = sbr.rel (%p182) target = $region20
        $region19: #{tpu_custom_call.1} parent=11 // pred_region
          _
        $region20: #{tpu_custom_call.1} parent=11 // pred_fallthru
          _
        // Predicated region
        $region21: #{tpu_custom_call.1} parent=11 // pred_check
          %p185 = pneg %p107
        $region22: #{tpu_custom_call.1} parent=11 // pred_check_branch
          %187 = sbr.rel (%p185) target = $region24
        $region23: #{tpu_custom_call.1} parent=11 // pred_region
          %s189 = ssub.s32 6144, 6144
          %190 = vsyncadd [#allocation8], %s189
          %s191 = sshll.u32 [#allocation9], 4
          %s192 = int_to_ptr.vmem [resolvable:$true] %s191
          %197 = dma.hbm_to_vmem [thread:$0]  %s3, 6144, %s192, [#allocation8], 128, 128, 8
        $region24: #{tpu_custom_call.1} parent=11 // pred_fallthru
          _
        // Predicated region
        $region25: #{tpu_custom_call.1} parent=11 // pred_check
          %p198 = pneg %p128
        $region26: #{tpu_custom_call.1} parent=11 // pred_check_branch
          %200 = sbr.rel (%p198) target = $region28
        $region27: #{tpu_custom_call.1} parent=11 // pred_region
          _
        $region28: #{tpu_custom_call.1} parent=11 // pred_fallthru
          _
      $region12: #{tpu_custom_call.1} parent=5 // pred_fallthru
        _
      %p201 = scmp.lt.s32.totalorder %s18, 2
      // Predicated region
      $region29: #{tpu_custom_call.1} parent=5 // pred_check
        %p202 = pneg %p201
      $region30: #{tpu_custom_call.1} parent=5 // pred_check_branch
        %204 = sbr.rel (%p202) target = $region32
      $region31: #{tpu_custom_call.1} parent=5 // pred_region
        // Predicated region
        $region33: #{tpu_custom_call.1} parent=31 // pred_check
          %p205 = pneg %p38
        $region34: #{tpu_custom_call.1} parent=31 // pred_check_branch
          %207 = sbr.rel (%p205) target = $region36
        $region35: #{tpu_custom_call.1} parent=31 // pred_region
          %s208 = sand.u32 %s28, 1
          %s209 = scalar_lea.sflag [#allocation5], %s208
          %s210 = sand.u32 %s28, 1
          %s211 = smul.addr %s210, 16
          %s212 = scalar_lea.vmem [#allocation4], %s211
          %s214 = ssub.s32 256, 256
          %215 = vsyncadd %s209, %s214
          %s216 = smul.addr %s18, 2
          %s217 = smul.addr %s216, 128
          %s218 = scalar_lea.hbm %s0, %s217
          %s219 = sshll.u32 %s212, 4
          %s220 = int_to_ptr.vmem [resolvable:$true] %s219
          %225 = dma.hbm_to_vmem [thread:$0]  %s218, 256, %s220, %s209, 128, 128, 8
        $region36: #{tpu_custom_call.1} parent=31 // pred_fallthru
          _
      $region32: #{tpu_custom_call.1} parent=5 // pred_fallthru
        _
      %p226 = scmp.le.s32.totalorder 1, %s18
      %p227 = scmp.lt.s32.totalorder %s18, 3
      %p228 = pnand %p226, %p227
      %p229 = pneg %p228
      // Predicated region
      $region37: #{tpu_custom_call.1} parent=5 // pred_check
        _
      $region38: #{tpu_custom_call.1} parent=5 // pred_check_branch
        %231 = sbr.rel (%p228) target = $region40
      $region39: #{tpu_custom_call.1} parent=5 // pred_region
        %s232 = ssub.s32 %s18, 1
        %s233 = sand.u32 %s31, 1
        %s234 = scalar_lea.sflag [#allocation5], %s233
        %s235 = sand.u32 %s31, 1
        %s236 = smul.addr %s235, 16
        %s237 = scalar_lea.vmem [#allocation4], %s236
        // Predicated region
        $region41: #{tpu_custom_call.1} parent=39 // pred_check
          %p238 = pneg %p44
        $region42: #{tpu_custom_call.1} parent=39 // pred_check_branch
          %240 = sbr.rel (%p238) target = $region44
        $region43: #{tpu_custom_call.1} parent=39 // pred_region
          %241 = dma.done %s234, 256
        $region44: #{tpu_custom_call.1} parent=39 // pred_fallthru
          _
        // Predicated region
        $region45: #{tpu_custom_call.1} parent=39 // pred_check
          %p242 = pneg %p65
        $region46: #{tpu_custom_call.1} parent=39 // pred_check_branch
          %244 = sbr.rel (%p242) target = $region48
        $region47: #{tpu_custom_call.1} parent=39 // pred_region
          %245 = dma.done [#allocation8], 3072
        $region48: #{tpu_custom_call.1} parent=39 // pred_fallthru
          _
        // Predicated region
        $region49: #{tpu_custom_call.1} parent=39 // pred_check
          %p246 = pneg %p107
        $region50: #{tpu_custom_call.1} parent=39 // pred_check_branch
          %248 = sbr.rel (%p246) target = $region52
        $region51: #{tpu_custom_call.1} parent=39 // pred_region
          %249 = dma.done [#allocation8], 6144
        $region52: #{tpu_custom_call.1} parent=39 // pred_fallthru
          _
        %s250 = sand.u32 %s31, 1
        %s251 = scalar_lea.sflag [#allocation5], %s250
        %s252 = sand.u32 %s31, 1
        %s253 = smul.addr %s252, 16
        %s254 = scalar_lea.vmem [#allocation4], %s253
        %p255 = pneg %p44
        %p256 = pneg %p41
        %p257 = pneg %p65
        %p258 = pneg %p62
        %p259 = pneg %p86
        %p260 = pneg %p83
        %p261 = pneg %p107
        %p262 = pneg %p104
        %p263 = pneg %p128
        %p264 = pneg %p125
        %p265 = pneg %p154
        %p266 = pneg %p151
        %s267 = sand.u32 %s141, 1
        %s268 = scalar_lea.sflag [#allocation6], %s267
        %s269 = sand.u32 %s141, 1
        %s270 = smul.addr %s269, 16
        %s271 = scalar_lea.vmem [#allocation10], %s270
        %vm272 = vcmask 516096
        %273 = vst.msk [vmem:[#allocation2] sm:$0x1] %vm272, 0.0
        %v274 = vld [vmem:[%s237] sm:$0xff]
        %v275 = vld [vmem:[%s237 + $0x8] sm:$0xff]
        %vm276 = vcmask 523264
        %277 = vst.msk [vmem:[#allocation2 + $0x1] sm:$0xff] %vm276, %v274
        %278 = vst.msk [vmem:[#allocation2 + $0x9] sm:$0xff] %vm276, %v275
        %279 = vst.msk [vmem:[#allocation2 + $0x11] sm:$0x1] %vm272, 0.0
        %v280 = vld [vmem:[#allocation2] sm:$0xff]
        %v281 = vld [vmem:[#allocation2 + $0x8] sm:$0xff]
        %v282 = vld [vmem:[#allocation7] sm:$0xff]
        %v283 = vld [vmem:[#allocation7 + $0x8] sm:$0xff]
        %v284 = vld [vmem:[#allocation7 + $0x10] sm:$0xff]
        %v285 = vld [vmem:[#allocation7 + $0x18] sm:$0xff]
        %v286 = vld [vmem:[#allocation7 + $0x20] sm:$0xff]
        %v287 = vld [vmem:[#allocation7 + $0x28] sm:$0xff]
        %v288 = vld [vmem:[#allocation7 + $0x30] sm:$0xff]
        %v289 = vld [vmem:[#allocation7 + $0x38] sm:$0xff]
        %v290 = vld [vmem:[#allocation2 + $0x1] sm:$0xff]
        %v291 = vld [vmem:[#allocation2 + $0x9] sm:$0xff]
        %s292 = scalar_lea.vmem [#allocation7], 64
        %v293 = vld [vmem:[%s292] sm:$0xff]
        %v294 = vld [vmem:[%s292 + $0x8] sm:$0xff]
        %v295 = vld [vmem:[%s292 + $0x10] sm:$0xff]
        %v296 = vld [vmem:[%s292 + $0x18] sm:$0xff]
        %v297 = vld [vmem:[%s292 + $0x20] sm:$0xff]
        %v298 = vld [vmem:[%s292 + $0x28] sm:$0xff]
        %v299 = vld [vmem:[%s292 + $0x30] sm:$0xff]
        %v300 = vld [vmem:[%s292 + $0x38] sm:$0xff]
        %v302 = vsel %vm276, %v290, 0
        %v305 = vsel %vm276, %v291, 0
        %307 = vmatprep.subr.mxu0 0.0
        %308 = vmatpush1.msra.mxu0 %v293
        %309 = vmatprep.subr.mxu0 0.0
        %310 = vmatpush1.msra.mxu0 %v294
        %311 = vmatprep.subr.mxu0 0.0
        %312 = vmatpush1.msra.mxu0 %v295
        %313 = vmatprep.subr.mxu0 0.0
        %314 = vmatpush1.msra.mxu0 %v296
        %315 = vmatprep.subr.mxu0 0.0
        %316 = vmatpush1.msra.mxu0 %v297
        %317 = vmatprep.subr.mxu0 0.0
        %318 = vmatpush1.msra.mxu0 %v298
        %319 = vmatprep.subr.mxu0 0.0
        %320 = vmatpush1.msra.mxu0 %v299
        %321 = vmatprep.subr.mxu0 0.0
        %322 = vmatpush1.msra.mxu0 %v300
        %323 = vmatprep.subr.mxu0 0.0
        %324 = vmatpush1.msra.mxu0 0.0
        %325 = vmatprep.subr.mxu0 0.0
        %326 = vmatpush1.msra.mxu0 0.0
        %327 = vmatprep.subr.mxu0 0.0
        %328 = vmatpush1.msra.mxu0 0.0
        %329 = vmatprep.subr.mxu0 0.0
        %330 = vmatpush1.msra.mxu0 0.0
        %331 = vmatprep.subr.mxu0 0.0
        %332 = vmatpush1.msra.mxu0 0.0
        %333 = vmatprep.subr.mxu0 0.0
        %334 = vmatpush1.msra.mxu0 0.0
        %335 = vmatprep.subr.mxu0 0.0
        %336 = vmatpush1.msra.mxu0 0.0
        %337 = vmatprep.subr.mxu0 0.0
        %338 = vmatpush1.msra.mxu0 0.0
        %339 = vmatprep.subr.mxu0 0.0
        %340 = vmatpush1.msra.mxu0 0.0
        %341 = vmatprep.subr.mxu0 0.0
        %342 = vmatpush1.msra.mxu0 0.0
        %343 = vmatprep.subr.mxu0 0.0
        %344 = vmatpush1.msra.mxu0 0.0
        %345 = vmatprep.subr.mxu0 0.0
        %346 = vmatpush1.msra.mxu0 0.0
        %347 = vmatprep.subr.mxu0 0.0
        %348 = vmatpush1.msra.mxu0 0.0
        %349 = vmatprep.subr.mxu0 0.0
        %350 = vmatpush1.msra.mxu0 0.0
        %351 = vmatprep.subr.mxu0 0.0
        %352 = vmatpush1.msra.mxu0 0.0
        %353 = vmatprep.subr.mxu0 0.0
        %354 = vmatpush1.msra.mxu0 0.0
        %355 = vmatprep.subr.mxu0 0.0
        %356 = vmatpush1.msra.mxu0 0.0
        %357 = vmatprep.subr.mxu0 0.0
        %358 = vmatpush1.msra.mxu0 0.0
        %359 = vmatprep.subr.mxu0 0.0
        %360 = vmatpush1.msra.mxu0 0.0
        %361 = vmatprep.subr.mxu0 0.0
        %362 = vmatpush1.msra.mxu0 0.0
        %363 = vmatprep.subr.mxu0 0.0
        %364 = vmatpush1.msra.mxu0 0.0
        %365 = vmatprep.subr.mxu0 0.0
        %366 = vmatpush1.msra.mxu0 0.0
        %367 = vmatprep.subr.mxu0 0.0
        %368 = vmatpush1.msra.mxu0 0.0
        %369 = vmatprep.subr.mxu0 0.0
        %370 = vmatpush1.msra.mxu0 0.0
        %371 = vmatprep.mubr.f32.mxu0 0.0
        %372 = vmatmul.mubr.f32.gmra.mrb[0].mxu0 %v302
        %v373 = vpop.f32.mrb[0].mxu0
        %v374 = vadd.f32 0.0, %v373
        %v375 = vpop.f32.mrb[0].mxu0
        %376 = vmatprep.mubr.f32.mxu0 0.0
        %377 = vmatmul.mubr.f32.gmra.mrb[0].mxu0 %v305
        %v378 = vpop.f32.mrb[0].mxu0
        %v379 = vadd.f32 0.0, %v378
        %v380 = vpop.f32.mrb[0].mxu0
        %381 = vdwg.mxu0
        %v383 = vsel %vm276, %v280, 0
        %v386 = vsel %vm276, %v281, 0
        %388 = vmatprep.subr.mxu0 0.0
        %389 = vmatpush1.msra.mxu0 %v282
        %390 = vmatprep.subr.mxu0 0.0
        %391 = vmatpush1.msra.mxu0 %v283
        %392 = vmatprep.subr.mxu0 0.0
        %393 = vmatpush1.msra.mxu0 %v284
        %394 = vmatprep.subr.mxu0 0.0
        %395 = vmatpush1.msra.mxu0 %v285
        %396 = vmatprep.subr.mxu0 0.0
        %397 = vmatpush1.msra.mxu0 %v286
        %398 = vmatprep.subr.mxu0 0.0
        %399 = vmatpush1.msra.mxu0 %v287
        %400 = vmatprep.subr.mxu0 0.0
        %401 = vmatpush1.msra.mxu0 %v288
        %402 = vmatprep.subr.mxu0 0.0
        %403 = vmatpush1.msra.mxu0 %v289
        %404 = vmatprep.subr.mxu0 0.0
        %405 = vmatpush1.msra.mxu0 0.0
        %406 = vmatprep.subr.mxu0 0.0
        %407 = vmatpush1.msra.mxu0 0.0
        %408 = vmatprep.subr.mxu0 0.0
        %409 = vmatpush1.msra.mxu0 0.0
        %410 = vmatprep.subr.mxu0 0.0
        %411 = vmatpush1.msra.mxu0 0.0
        %412 = vmatprep.subr.mxu0 0.0
        %413 = vmatpush1.msra.mxu0 0.0
        %414 = vmatprep.subr.mxu0 0.0
        %415 = vmatpush1.msra.mxu0 0.0
        %416 = vmatprep.subr.mxu0 0.0
        %417 = vmatpush1.msra.mxu0 0.0
        %418 = vmatprep.subr.mxu0 0.0
        %419 = vmatpush1.msra.mxu0 0.0
        %420 = vmatprep.subr.mxu0 0.0
        %421 = vmatpush1.msra.mxu0 0.0
        %422 = vmatprep.subr.mxu0 0.0
        %423 = vmatpush1.msra.mxu0 0.0
        %424 = vmatprep.subr.mxu0 0.0
        %425 = vmatpush1.msra.mxu0 0.0
        %426 = vmatprep.subr.mxu0 0.0
        %427 = vmatpush1.msra.mxu0 0.0
        %428 = vmatprep.subr.mxu0 0.0
        %429 = vmatpush1.msra.mxu0 0.0
        %430 = vmatprep.subr.mxu0 0.0
        %431 = vmatpush1.msra.mxu0 0.0
        %432 = vmatprep.subr.mxu0 0.0
        %433 = vmatpush1.msra.mxu0 0.0
        %434 = vmatprep.subr.mxu0 0.0
        %435 = vmatpush1.msra.mxu0 0.0
        %436 = vmatprep.subr.mxu0 0.0
        %437 = vmatpush1.msra.mxu0 0.0
        %438 = vmatprep.subr.mxu0 0.0
        %439 = vmatpush1.msra.mxu0 0.0
        %440 = vmatprep.subr.mxu0 0.0
        %441 = vmatpush1.msra.mxu0 0.0
        %442 = vmatprep.subr.mxu0 0.0
        %443 = vmatpush1.msra.mxu0 0.0
        %444 = vmatprep.subr.mxu0 0.0
        %445 = vmatpush1.msra.mxu0 0.0
        %446 = vmatprep.subr.mxu0 0.0
        %447 = vmatpush1.msra.mxu0 0.0
        %448 = vmatprep.subr.mxu0 0.0
        %449 = vmatpush1.msra.mxu0 0.0
        %450 = vmatprep.subr.mxu0 0.0
        %451 = vmatpush1.msra.mxu0 0.0
        %452 = vmatprep.mubr.f32.mxu0 0.0
        %453 = vmatmul.mubr.f32.gmra.mrb[0].mxu0 %v383
        %v454 = vpop.f32.mrb[0].mxu0
        %v455 = vadd.f32 %v374, %v454
        %v456 = vpop.f32.mrb[0].mxu0
        %457 = vmatprep.mubr.f32.mxu0 0.0
        %458 = vmatmul.mubr.f32.gmra.mrb[0].mxu0 %v386
        %v459 = vpop.f32.mrb[0].mxu0
        %v460 = vadd.f32 %v379, %v459
        %v461 = vpop.f32.mrb[0].mxu0
        %462 = vdwg.mxu0
        %v463 = vld [vmem:[#allocation2 + $0x2] sm:$0xff]
        %v464 = vld [vmem:[#allocation2 + $0xa] sm:$0xff]
        %s465 = scalar_lea.vmem [#allocation7], 128
        %v466 = vld [vmem:[%s465] sm:$0xff]
        %v467 = vld [vmem:[%s465 + $0x8] sm:$0xff]
        %v468 = vld [vmem:[%s465 + $0x10] sm:$0xff]
        %v469 = vld [vmem:[%s465 + $0x18] sm:$0xff]
        %v470 = vld [vmem:[%s465 + $0x20] sm:$0xff]
        %v471 = vld [vmem:[%s465 + $0x28] sm:$0xff]
        %v472 = vld [vmem:[%s465 + $0x30] sm:$0xff]
        %v473 = vld [vmem:[%s465 + $0x38] sm:$0xff]
        %v475 = vsel %vm276, %v463, 0
        %v478 = vsel %vm276, %v464, 0
        %480 = vmatprep.subr.mxu0 0.0
        %481 = vmatpush1.msra.mxu0 %v466
        %482 = vmatprep.subr.mxu0 0.0
        %483 = vmatpush1.msra.mxu0 %v467
        %484 = vmatprep.subr.mxu0 0.0
        %485 = vmatpush1.msra.mxu0 %v468
        %486 = vmatprep.subr.mxu0 0.0
        %487 = vmatpush1.msra.mxu0 %v469
        %488 = vmatprep.subr.mxu0 0.0
        %489 = vmatpush1.msra.mxu0 %v470
        %490 = vmatprep.subr.mxu0 0.0
        %491 = vmatpush1.msra.mxu0 %v471
        %492 = vmatprep.subr.mxu0 0.0
        %493 = vmatpush1.msra.mxu0 %v472
        %494 = vmatprep.subr.mxu0 0.0
        %495 = vmatpush1.msra.mxu0 %v473
        %496 = vmatprep.subr.mxu0 0.0
        %497 = vmatpush1.msra.mxu0 0.0
        %498 = vmatprep.subr.mxu0 0.0
        %499 = vmatpush1.msra.mxu0 0.0
        %500 = vmatprep.subr.mxu0 0.0
        %501 = vmatpush1.msra.mxu0 0.0
        %502 = vmatprep.subr.mxu0 0.0
        %503 = vmatpush1.msra.mxu0 0.0
        %504 = vmatprep.subr.mxu0 0.0
        %505 = vmatpush1.msra.mxu0 0.0
        %506 = vmatprep.subr.mxu0 0.0
        %507 = vmatpush1.msra.mxu0 0.0
        %508 = vmatprep.subr.mxu0 0.0
        %509 = vmatpush1.msra.mxu0 0.0
        %510 = vmatprep.subr.mxu0 0.0
        %511 = vmatpush1.msra.mxu0 0.0
        %512 = vmatprep.subr.mxu0 0.0
        %513 = vmatpush1.msra.mxu0 0.0
        %514 = vmatprep.subr.mxu0 0.0
        %515 = vmatpush1.msra.mxu0 0.0
        %516 = vmatprep.subr.mxu0 0.0
        %517 = vmatpush1.msra.mxu0 0.0
        %518 = vmatprep.subr.mxu0 0.0
        %519 = vmatpush1.msra.mxu0 0.0
        %520 = vmatprep.subr.mxu0 0.0
        %521 = vmatpush1.msra.mxu0 0.0
        %522 = vmatprep.subr.mxu0 0.0
        %523 = vmatpush1.msra.mxu0 0.0
        %524 = vmatprep.subr.mxu0 0.0
        %525 = vmatpush1.msra.mxu0 0.0
        %526 = vmatprep.subr.mxu0 0.0
        %527 = vmatpush1.msra.mxu0 0.0
        %528 = vmatprep.subr.mxu0 0.0
        %529 = vmatpush1.msra.mxu0 0.0
        %530 = vmatprep.subr.mxu0 0.0
        %531 = vmatpush1.msra.mxu0 0.0
        %532 = vmatprep.subr.mxu0 0.0
        %533 = vmatpush1.msra.mxu0 0.0
        %534 = vmatprep.subr.mxu0 0.0
        %535 = vmatpush1.msra.mxu0 0.0
        %536 = vmatprep.subr.mxu0 0.0
        %537 = vmatpush1.msra.mxu0 0.0
        %538 = vmatprep.subr.mxu0 0.0
        %539 = vmatpush1.msra.mxu0 0.0
        %540 = vmatprep.subr.mxu0 0.0
        %541 = vmatpush1.msra.mxu0 0.0
        %542 = vmatprep.subr.mxu0 0.0
        %543 = vmatpush1.msra.mxu0 0.0
        %544 = vmatprep.mubr.f32.mxu0 0.0
        %545 = vmatmul.mubr.f32.gmra.mrb[0].mxu0 %v475
        %v546 = vpop.f32.mrb[0].mxu0
        %v547 = vadd.f32 0.0, %v546
        %v548 = vpop.f32.mrb[0].mxu0
        %549 = vmatprep.mubr.f32.mxu0 0.0
        %550 = vmatmul.mubr.f32.gmra.mrb[0].mxu0 %v478
        %v551 = vpop.f32.mrb[0].mxu0
        %v552 = vadd.f32 0.0, %v551
        %v553 = vpop.f32.mrb[0].mxu0
        %554 = vdwg.mxu0
        %v555 = vadd.f32 %v455, %v547
        %v556 = vadd.f32 %v460, %v552
        %v557 = vld [vmem:[%s2] sm:$0x1]
        %v559 = vlaneseq
        %v560 = vshrl.u32 %v559, 7
        %v561 = vsub.s32 0, %v560
        %v562 = vrot.slane %v557, %v561
        %v564 = vadd.f32 %v555, %v562
        %v565 = vadd.f32 %v556, %v562
        %v566 = vmax.f32 %v564, 0.0
        %v567 = vmax.f32 %v565, 0.0
        %568 = vst [vmem:[#allocation3] sm:$0x1] 0.0
        %569 = vst [vmem:[#allocation3 + $0x1] sm:$0xff] %v566
        %570 = vst [vmem:[#allocation3 + $0x9] sm:$0xff] %v567
        %571 = vst [vmem:[#allocation3 + $0x11] sm:$0x1] 0.0
        %v572 = vld [vmem:[#allocation3] sm:$0xff]
        %v573 = vld [vmem:[#allocation3 + $0x8] sm:$0xff]
        %v574 = vld [vmem:[#allocation9] sm:$0xff]
        %v575 = vld [vmem:[#allocation9 + $0x8] sm:$0xff]
        %v576 = vld [vmem:[#allocation9 + $0x10] sm:$0xff]
        %v577 = vld [vmem:[#allocation9 + $0x18] sm:$0xff]
        %v578 = vld [vmem:[#allocation9 + $0x20] sm:$0xff]
        %v579 = vld [vmem:[#allocation9 + $0x28] sm:$0xff]
        %v580 = vld [vmem:[#allocation9 + $0x30] sm:$0xff]
        %v581 = vld [vmem:[#allocation9 + $0x38] sm:$0xff]
        %v582 = vld [vmem:[#allocation9 + $0x40] sm:$0xff]
        %v583 = vld [vmem:[#allocation9 + $0x48] sm:$0xff]
        %v584 = vld [vmem:[#allocation9 + $0x50] sm:$0xff]
        %v585 = vld [vmem:[#allocation9 + $0x58] sm:$0xff]
        %v586 = vld [vmem:[#allocation9 + $0x60] sm:$0xff]
        %v587 = vld [vmem:[#allocation9 + $0x68] sm:$0xff]
        %v588 = vld [vmem:[#allocation9 + $0x70] sm:$0xff]
        %v589 = vld [vmem:[#allocation9 + $0x78] sm:$0xff]
        %v590 = vld [vmem:[#allocation3 + $0x1] sm:$0xff]
        %v591 = vld [vmem:[#allocation3 + $0x9] sm:$0xff]
        %s592 = scalar_lea.vmem [#allocation9], 128
        %v593 = vld [vmem:[%s592] sm:$0xff]
        %v594 = vld [vmem:[%s592 + $0x8] sm:$0xff]
        %v595 = vld [vmem:[%s592 + $0x10] sm:$0xff]
        %v596 = vld [vmem:[%s592 + $0x18] sm:$0xff]
        %v597 = vld [vmem:[%s592 + $0x20] sm:$0xff]
        %v598 = vld [vmem:[%s592 + $0x28] sm:$0xff]
        %v599 = vld [vmem:[%s592 + $0x30] sm:$0xff]
        %v600 = vld [vmem:[%s592 + $0x38] sm:$0xff]
        %v601 = vld [vmem:[%s592 + $0x40] sm:$0xff]
        %v602 = vld [vmem:[%s592 + $0x48] sm:$0xff]
        %v603 = vld [vmem:[%s592 + $0x50] sm:$0xff]
        %v604 = vld [vmem:[%s592 + $0x58] sm:$0xff]
        %v605 = vld [vmem:[%s592 + $0x60] sm:$0xff]
        %v606 = vld [vmem:[%s592 + $0x68] sm:$0xff]
        %v607 = vld [vmem:[%s592 + $0x70] sm:$0xff]
        %v608 = vld [vmem:[%s592 + $0x78] sm:$0xff]
        %609 = vmatprep.subr.mxu0 0.0
        %610 = vmatpush1.msra.mxu0 %v593
        %611 = vmatprep.subr.mxu0 0.0
        %612 = vmatpush1.msra.mxu0 %v594
        %613 = vmatprep.subr.mxu0 0.0
        %614 = vmatpush1.msra.mxu0 %v595
        %615 = vmatprep.subr.mxu0 0.0
        %616 = vmatpush1.msra.mxu0 %v596
        %617 = vmatprep.subr.mxu0 0.0
        %618 = vmatpush1.msra.mxu0 %v597
        %619 = vmatprep.subr.mxu0 0.0
        %620 = vmatpush1.msra.mxu0 %v598
        %621 = vmatprep.subr.mxu0 0.0
        %622 = vmatpush1.msra.mxu0 %v599
        %623 = vmatprep.subr.mxu0 0.0
        %624 = vmatpush1.msra.mxu0 %v600
        %625 = vmatprep.subr.mxu0 0.0
        %626 = vmatpush1.msra.mxu0 %v601
        %627 = vmatprep.subr.mxu0 0.0
        %628 = vmatpush1.msra.mxu0 %v602
        %629 = vmatprep.subr.mxu0 0.0
        %630 = vmatpush1.msra.mxu0 %v603
        %631 = vmatprep.subr.mxu0 0.0
        %632 = vmatpush1.msra.mxu0 %v604
        %633 = vmatprep.subr.mxu0 0.0
        %634 = vmatpush1.msra.mxu0 %v605
        %635 = vmatprep.subr.mxu0 0.0
        %636 = vmatpush1.msra.mxu0 %v606
        %637 = vmatprep.subr.mxu0 0.0
        %638 = vmatpush1.msra.mxu0 %v607
        %639 = vmatprep.subr.mxu0 0.0
        %640 = vmatpush1.msra.mxu0 %v608
        %641 = vmatprep.subr.mxu0 0.0
        %642 = vmatpush1.msra.mxu0 0.0
        %643 = vmatprep.subr.mxu0 0.0
        %644 = vmatpush1.msra.mxu0 0.0
        %645 = vmatprep.subr.mxu0 0.0
        %646 = vmatpush1.msra.mxu0 0.0
        %647 = vmatprep.subr.mxu0 0.0
        %648 = vmatpush1.msra.mxu0 0.0
        %649 = vmatprep.subr.mxu0 0.0
        %650 = vmatpush1.msra.mxu0 0.0
        %651 = vmatprep.subr.mxu0 0.0
        %652 = vmatpush1.msra.mxu0 0.0
        %653 = vmatprep.subr.mxu0 0.0
        %654 = vmatpush1.msra.mxu0 0.0
        %655 = vmatprep.subr.mxu0 0.0
        %656 = vmatpush1.msra.mxu0 0.0
        %657 = vmatprep.subr.mxu0 0.0
        %658 = vmatpush1.msra.mxu0 0.0
        %659 = vmatprep.subr.mxu0 0.0
        %660 = vmatpush1.msra.mxu0 0.0
        %661 = vmatprep.subr.mxu0 0.0
        %662 = vmatpush1.msra.mxu0 0.0
        %663 = vmatprep.subr.mxu0 0.0
        %664 = vmatpush1.msra.mxu0 0.0
        %665 = vmatprep.subr.mxu0 0.0
        %666 = vmatpush1.msra.mxu0 0.0
        %667 = vmatprep.subr.mxu0 0.0
        %668 = vmatpush1.msra.mxu0 0.0
        %669 = vmatprep.subr.mxu0 0.0
        %670 = vmatpush1.msra.mxu0 0.0
        %671 = vmatprep.subr.mxu0 0.0
        %672 = vmatpush1.msra.mxu0 0.0
        %673 = vmatprep.mubr.f32.mxu0 0.0
        %674 = vmatmul.mubr.f32.gmra.mrb[0].mxu0 %v590
        %v675 = vpop.f32.mrb[0].mxu0
        %v676 = vadd.f32 0.0, %v675
        %v677 = vpop.f32.mrb[0].mxu0
        %678 = vmatprep.mubr.f32.mxu0 0.0
        %679 = vmatmul.mubr.f32.gmra.mrb[0].mxu0 %v591
        %v680 = vpop.f32.mrb[0].mxu0
        %v681 = vadd.f32 0.0, %v680
        %v682 = vpop.f32.mrb[0].mxu0
        %683 = vdwg.mxu0
        %684 = vmatprep.subr.mxu0 0.0
        %685 = vmatpush1.msra.mxu0 %v574
        %686 = vmatprep.subr.mxu0 0.0
        %687 = vmatpush1.msra.mxu0 %v575
        %688 = vmatprep.subr.mxu0 0.0
        %689 = vmatpush1.msra.mxu0 %v576
        %690 = vmatprep.subr.mxu0 0.0
        %691 = vmatpush1.msra.mxu0 %v577
        %692 = vmatprep.subr.mxu0 0.0
        %693 = vmatpush1.msra.mxu0 %v578
        %694 = vmatprep.subr.mxu0 0.0
        %695 = vmatpush1.msra.mxu0 %v579
        %696 = vmatprep.subr.mxu0 0.0
        %697 = vmatpush1.msra.mxu0 %v580
        %698 = vmatprep.subr.mxu0 0.0
        %699 = vmatpush1.msra.mxu0 %v581
        %700 = vmatprep.subr.mxu0 0.0
        %701 = vmatpush1.msra.mxu0 %v582
        %702 = vmatprep.subr.mxu0 0.0
        %703 = vmatpush1.msra.mxu0 %v583
        %704 = vmatprep.subr.mxu0 0.0
        %705 = vmatpush1.msra.mxu0 %v584
        %706 = vmatprep.subr.mxu0 0.0
        %707 = vmatpush1.msra.mxu0 %v585
        %708 = vmatprep.subr.mxu0 0.0
        %709 = vmatpush1.msra.mxu0 %v586
        %710 = vmatprep.subr.mxu0 0.0
        %711 = vmatpush1.msra.mxu0 %v587
        %712 = vmatprep.subr.mxu0 0.0
        %713 = vmatpush1.msra.mxu0 %v588
        %714 = vmatprep.subr.mxu0 0.0
        %715 = vmatpush1.msra.mxu0 %v589
        %716 = vmatprep.subr.mxu0 0.0
        %717 = vmatpush1.msra.mxu0 0.0
        %718 = vmatprep.subr.mxu0 0.0
        %719 = vmatpush1.msra.mxu0 0.0
        %720 = vmatprep.subr.mxu0 0.0
        %721 = vmatpush1.msra.mxu0 0.0
        %722 = vmatprep.subr.mxu0 0.0
        %723 = vmatpush1.msra.mxu0 0.0
        %724 = vmatprep.subr.mxu0 0.0
        %725 = vmatpush1.msra.mxu0 0.0
        %726 = vmatprep.subr.mxu0 0.0
        %727 = vmatpush1.msra.mxu0 0.0
        %728 = vmatprep.subr.mxu0 0.0
        %729 = vmatpush1.msra.mxu0 0.0
        %730 = vmatprep.subr.mxu0 0.0
        %731 = vmatpush1.msra.mxu0 0.0
        %732 = vmatprep.subr.mxu0 0.0
        %733 = vmatpush1.msra.mxu0 0.0
        %734 = vmatprep.subr.mxu0 0.0
        %735 = vmatpush1.msra.mxu0 0.0
        %736 = vmatprep.subr.mxu0 0.0
        %737 = vmatpush1.msra.mxu0 0.0
        %738 = vmatprep.subr.mxu0 0.0
        %739 = vmatpush1.msra.mxu0 0.0
        %740 = vmatprep.subr.mxu0 0.0
        %741 = vmatpush1.msra.mxu0 0.0
        %742 = vmatprep.subr.mxu0 0.0
        %743 = vmatpush1.msra.mxu0 0.0
        %744 = vmatprep.subr.mxu0 0.0
        %745 = vmatpush1.msra.mxu0 0.0
        %746 = vmatprep.subr.mxu0 0.0
        %747 = vmatpush1.msra.mxu0 0.0
        %748 = vmatprep.mubr.f32.mxu0 0.0
        %749 = vmatmul.mubr.f32.gmra.mrb[0].mxu0 %v572
        %v750 = vpop.f32.mrb[0].mxu0
        %v751 = vadd.f32 %v676, %v750
        %v752 = vpop.f32.mrb[0].mxu0
        %753 = vmatprep.mubr.f32.mxu0 0.0
        %754 = vmatmul.mubr.f32.gmra.mrb[0].mxu0 %v573
        %v755 = vpop.f32.mrb[0].mxu0
        %v756 = vadd.f32 %v681, %v755
        %v757 = vpop.f32.mrb[0].mxu0
        %758 = vdwg.mxu0
        %v759 = vld [vmem:[#allocation3 + $0x2] sm:$0xff]
        %v760 = vld [vmem:[#allocation3 + $0xa] sm:$0xff]
        %s761 = scalar_lea.vmem [#allocation9], 256
        %v762 = vld [vmem:[%s761] sm:$0xff]
        %v763 = vld [vmem:[%s761 + $0x8] sm:$0xff]
        %v764 = vld [vmem:[%s761 + $0x10] sm:$0xff]
        %v765 = vld [vmem:[%s761 + $0x18] sm:$0xff]
        %v766 = vld [vmem:[%s761 + $0x20] sm:$0xff]
        %v767 = vld [vmem:[%s761 + $0x28] sm:$0xff]
        %v768 = vld [vmem:[%s761 + $0x30] sm:$0xff]
        %v769 = vld [vmem:[%s761 + $0x38] sm:$0xff]
        %v770 = vld [vmem:[%s761 + $0x40] sm:$0xff]
        %v771 = vld [vmem:[%s761 + $0x48] sm:$0xff]
        %v772 = vld [vmem:[%s761 + $0x50] sm:$0xff]
        %v773 = vld [vmem:[%s761 + $0x58] sm:$0xff]
        %v774 = vld [vmem:[%s761 + $0x60] sm:$0xff]
        %v775 = vld [vmem:[%s761 + $0x68] sm:$0xff]
        %v776 = vld [vmem:[%s761 + $0x70] sm:$0xff]
        %v777 = vld [vmem:[%s761 + $0x78] sm:$0xff]
        %778 = vmatprep.subr.mxu0 0.0
        %779 = vmatpush1.msra.mxu0 %v762
        %780 = vmatprep.subr.mxu0 0.0
        %781 = vmatpush1.msra.mxu0 %v763
        %782 = vmatprep.subr.mxu0 0.0
        %783 = vmatpush1.msra.mxu0 %v764
        %784 = vmatprep.subr.mxu0 0.0
        %785 = vmatpush1.msra.mxu0 %v765
        %786 = vmatprep.subr.mxu0 0.0
        %787 = vmatpush1.msra.mxu0 %v766
        %788 = vmatprep.subr.mxu0 0.0
        %789 = vmatpush1.msra.mxu0 %v767
        %790 = vmatprep.subr.mxu0 0.0
        %791 = vmatpush1.msra.mxu0 %v768
        %792 = vmatprep.subr.mxu0 0.0
        %793 = vmatpush1.msra.mxu0 %v769
        %794 = vmatprep.subr.mxu0 0.0
        %795 = vmatpush1.msra.mxu0 %v770
        %796 = vmatprep.subr.mxu0 0.0
        %797 = vmatpush1.msra.mxu0 %v771
        %798 = vmatprep.subr.mxu0 0.0
        %799 = vmatpush1.msra.mxu0 %v772
        %800 = vmatprep.subr.mxu0 0.0
        %801 = vmatpush1.msra.mxu0 %v773
        %802 = vmatprep.subr.mxu0 0.0
        %803 = vmatpush1.msra.mxu0 %v774
        %804 = vmatprep.subr.mxu0 0.0
        %805 = vmatpush1.msra.mxu0 %v775
        %806 = vmatprep.subr.mxu0 0.0
        %807 = vmatpush1.msra.mxu0 %v776
        %808 = vmatprep.subr.mxu0 0.0
        %809 = vmatpush1.msra.mxu0 %v777
        %810 = vmatprep.subr.mxu0 0.0
        %811 = vmatpush1.msra.mxu0 0.0
        %812 = vmatprep.subr.mxu0 0.0
        %813 = vmatpush1.msra.mxu0 0.0
        %814 = vmatprep.subr.mxu0 0.0
        %815 = vmatpush1.msra.mxu0 0.0
        %816 = vmatprep.subr.mxu0 0.0
        %817 = vmatpush1.msra.mxu0 0.0
        %818 = vmatprep.subr.mxu0 0.0
        %819 = vmatpush1.msra.mxu0 0.0
        %820 = vmatprep.subr.mxu0 0.0
        %821 = vmatpush1.msra.mxu0 0.0
        %822 = vmatprep.subr.mxu0 0.0
        %823 = vmatpush1.msra.mxu0 0.0
        %824 = vmatprep.subr.mxu0 0.0
        %825 = vmatpush1.msra.mxu0 0.0
        %826 = vmatprep.subr.mxu0 0.0
        %827 = vmatpush1.msra.mxu0 0.0
        %828 = vmatprep.subr.mxu0 0.0
        %829 = vmatpush1.msra.mxu0 0.0
        %830 = vmatprep.subr.mxu0 0.0
        %831 = vmatpush1.msra.mxu0 0.0
        %832 = vmatprep.subr.mxu0 0.0
        %833 = vmatpush1.msra.mxu0 0.0
        %834 = vmatprep.subr.mxu0 0.0
        %835 = vmatpush1.msra.mxu0 0.0
        %836 = vmatprep.subr.mxu0 0.0
        %837 = vmatpush1.msra.mxu0 0.0
        %838 = vmatprep.subr.mxu0 0.0
        %839 = vmatpush1.msra.mxu0 0.0
        %840 = vmatprep.subr.mxu0 0.0
        %841 = vmatpush1.msra.mxu0 0.0
        %842 = vmatprep.mubr.f32.mxu0 0.0
        %843 = vmatmul.mubr.f32.gmra.mrb[0].mxu0 %v759
        %v844 = vpop.f32.mrb[0].mxu0
        %v845 = vadd.f32 0.0, %v844
        %v846 = vpop.f32.mrb[0].mxu0
        %847 = vmatprep.mubr.f32.mxu0 0.0
        %848 = vmatmul.mubr.f32.gmra.mrb[0].mxu0 %v760
        %v849 = vpop.f32.mrb[0].mxu0
        %v850 = vadd.f32 0.0, %v849
        %v851 = vpop.f32.mrb[0].mxu0
        %852 = vdwg.mxu0
        %v853 = vadd.f32 %v751, %v845
        %v854 = vadd.f32 %v756, %v850
        %v855 = vld [vmem:[%s4] sm:$0x1]
        %v857 = vlaneseq
        %v858 = vshrl.u32 %v857, 7
        %v859 = vsub.s32 0, %v858
        %v860 = vrot.slane %v855, %v859
        %v862 = vadd.f32 %v853, %v860
        %v863 = vadd.f32 %v854, %v860
        %v864 = vmax.f32 %v862, 0.0
        %v865 = vmax.f32 %v863, 0.0
        %866 = vst [vmem:[%s271] sm:$0xff] %v864
        %867 = vst [vmem:[%s271 + $0x8] sm:$0xff] %v865
        %s868 = sand.u32 %s141, 1
        %s869 = scalar_lea.sflag [#allocation6], %s868
        %s870 = sand.u32 %s141, 1
        %s871 = smul.addr %s870, 16
        %s872 = scalar_lea.vmem [#allocation10], %s871
        // Predicated region
        $region53: #{tpu_custom_call.1} parent=39 // pred_check
          %p873 = pneg %p151
        $region54: #{tpu_custom_call.1} parent=39 // pred_check_branch
          %875 = sbr.rel (%p873) target = $region56
        $region55: #{tpu_custom_call.1} parent=39 // pred_region
          %s877 = ssub.s32 256, 256
          %878 = vsyncadd %s869, %s877
          %s879 = smul.addr %s23, 2
          %s880 = smul.addr %s879, 128
          %s881 = scalar_lea.hbm %s5, %s880
          %s882 = sshll.u32 %s872, 4
          %s883 = int_to_ptr.vmem [resolvable:$true] %s882
          %888 = dma.vmem_to_hbm [thread:$0]  %s883, 256, %s881, %s869, 128, 128, 8
        $region56: #{tpu_custom_call.1} parent=39 // pred_fallthru
          _
      $region40: #{tpu_custom_call.1} parent=5 // pred_fallthru
        _
      %p889 = scmp.le.s32.totalorder 2, %s18
      // Predicated region
      $region57: #{tpu_custom_call.1} parent=5 // pred_check
        %p890 = pneg %p889
      $region58: #{tpu_custom_call.1} parent=5 // pred_check_branch
        %892 = sbr.rel (%p890) target = $region60
      $region59: #{tpu_custom_call.1} parent=5 // pred_region
        %s893 = ssub.s32 %s18, 2
        // Predicated region
        $region61: #{tpu_custom_call.1} parent=59 // pred_check
          %p894 = pneg %p157
        $region62: #{tpu_custom_call.1} parent=59 // pred_check_branch
          %896 = sbr.rel (%p894) target = $region64
        $region63: #{tpu_custom_call.1} parent=59 // pred_region
          %s897 = sand.u32 %s142, 1
          %s898 = scalar_lea.sflag [#allocation6], %s897
          %s899 = sand.u32 %s142, 1
          %s900 = smul.addr %s899, 16
          %s901 = scalar_lea.vmem [#allocation10], %s900
          %902 = dma.done %s898, 256
        $region64: #{tpu_custom_call.1} parent=59 // pred_fallthru
          _
      $region60: #{tpu_custom_call.1} parent=5 // pred_fallthru
        _
    $region6: #{tpu_custom_call.1} parent=1 // loop_footer
      %s22 = sadd.s32 1, %s18
    $region7: #{tpu_custom_call.1} parent=1 // loop_footer_branch
      %17 = sbr.rel target = $region3
    $region8: #{tpu_custom_call.1} parent=1 // loop_exit
      _
    %903 = vsyncpa [#allocation5], 1
    %s904 = scalar_lea.sflag [#allocation5], 1
    %905 = vsyncpa %s904, 1
    %906 = vsyncpa [#allocation8], 1
    %907 = vsyncpa [#allocation6], 1
    %s908 = scalar_lea.sflag [#allocation6], 1
    %909 = vsyncpa %s908, 1

</llo_original>
